<compile_context>
chip_gen: v7x
topology: tpu7x:2x2x1
jax: 0.10.0
libtpu: 0.0.40
codegen_flags: <defaults>
</compile_context>

<pallas_src>
import jax
import jax.numpy as jnp
from jax.experimental import pallas as pl
from jax.experimental.pallas import tpu as pltpu


# ----------------------------------------------------------------------------
# Kernel 1: fused InstanceNorm -> Mask -> gating -> GeM pooling for `bpg`
# batch elements per grid step.
# ----------------------------------------------------------------------------
def _rgb_teacher_pool_kernel(
    x_ref,       # (bpg, HW, C) f32   backbone features, C on the lane axis
    gamma_ref,   # (1, C)       f32   InstanceNorm affine weight
    beta_ref,    # (1, C)       f32   InstanceNorm affine bias
    w1t_ref,     # (C, Cr)      bf16  Mask conv1 (1x1, no bias), pre-transposed
    w2t_ref,     # (Cr, C)      bf16  Mask conv2 (1x1, no bias), pre-transposed
    pooled_ref,  # (bpg, C)     f32   GeM-pooled features (lane-dense)
):
    bpg, hw, c = x_ref.shape
    inv_hw = 1.0 / hw

    x = x_ref[...]                                          # (bpg, HW, C) f32

    # ---- InstanceNorm2d (training-mode instance stats, biased var, eps=1e-5),
    # one-pass statistics, reduction over HW = sublane direction.
    s1 = jnp.sum(x, axis=1, keepdims=True)                  # (bpg, 1, C)
    s2 = jnp.sum(x * x, axis=1, keepdims=True)              # (bpg, 1, C)
    mean = s1 * inv_hw
    var = s2 * inv_hw - mean * mean
    scale = gamma_ref[...] * jax.lax.rsqrt(var + 1e-5)      # (bpg, 1, C)
    shift = beta_ref[...] - mean * scale                    # (bpg, 1, C)

    # ---- Mask: 1x1 conv -> ReLU -> 1x1 conv -> Sigmoid.
    # bf16 on the MXU with f32 accumulation; the batch pair is flattened into
    # M = bpg*HW to fill the 256-wide MXU on v6e/v7x.
    x_in_b = (x * scale + shift).astype(jnp.bfloat16)       # (bpg, HW, C) bf16
    h = jnp.dot(x_in_b.reshape(bpg * hw, c), w1t_ref[...],
                preferred_element_type=jnp.float32)         # (bpg*HW, Cr)
    h = jnp.maximum(h, 0.0).astype(jnp.bfloat16)
    m = jnp.dot(h, w2t_ref[...],
                preferred_element_type=jnp.float32)         # (bpg*HW, C)
    m = jax.nn.sigmoid(m).reshape(bpg, hw, c)               # f32 mask

    # ---- gated features + GeM pooling: mean(clamp(y, eps)^3)^(1/3).
    # x_in (f32) is recomputed from the VMEM input block (one FMA) instead of
    # being kept live across both matmuls (bounds vreg pressure / spills).
    x_in = x_ref[...] * scale + shift                       # (bpg, HW, C) f32
    y = jnp.maximum(x_in * m, 1e-6)
    y3 = y * y * y
    pooled_ref[...] = (jnp.sum(y3, axis=1) * inv_hw) ** (1.0 / 3.0)  # (bpg, C)


# ----------------------------------------------------------------------------
# Kernel 2: batched classifier  (B, C) @ (C, NC_pad) -> (B, NC_pad), bias=False.
# ----------------------------------------------------------------------------
def _classifier_kernel(pooled_ref, wc_ref, out_ref):
    out_ref[...] = jnp.dot(pooled_ref[...].astype(jnp.bfloat16), wc_ref[...],
                           preferred_element_type=jnp.float32)


# ----------------------------------------------------------------------------
# One-time parameter preparation (hoisted out of the per-forward path).
# ----------------------------------------------------------------------------
def prepare_rgb_teacher_params(gamma, beta, w1, w2, wc):
    C = gamma.shape[0]
    NC = wc.shape[0]
    NC_pad = ((NC + 127) // 128) * 128                    # lane-dense classifier out
    wc_t = jnp.transpose(wc).astype(jnp.bfloat16)         # (C, NC)
    if NC_pad != NC:
        wc_t = jnp.pad(wc_t, ((0, 0), (0, NC_pad - NC)))
    return {
        "gamma": gamma.reshape(1, C).astype(jnp.float32),
        "beta": beta.reshape(1, C).astype(jnp.float32),
        "w1t": jnp.transpose(w1).astype(jnp.bfloat16),     # (C, Cr)
        "w2t": jnp.transpose(w2).astype(jnp.bfloat16),     # (Cr, C)
        "wc_t": wc_t,                                      # (C, NC_pad)
        "num_classes": NC,
    }


def rgb_teacher_head(x_nchw, params):
    """x_nchw: (B, C, H, W) float32 backbone features.  Returns (B, NC) logits."""
    B, C, H, W = x_nchw.shape
    HW = H * W
    Cr = params["w1t"].shape[1]
    NC_pad = params["wc_t"].shape[1]
    NC = params["num_classes"]

    # NHWC-style layout with C on the lane axis.  If the backbone runs on TPU,
    # its layer4 output is typically already NHWC and this transpose vanishes;
    # here it is a single XLA op outside the kernel.
    x = jnp.transpose(x_nchw.reshape(B, C, HW), (0, 2, 1))  # (B, HW, C)

    # Two batch elements per grid step (when possible) to fill the 256-wide MXU
    # on v6e/v7x; batch axis stays "parallel" for megacore sharding.
    bpg = 2 if B % 2 == 0 else 1

    pooled = pl.pallas_call(
        _rgb_teacher_pool_kernel,
        out_shape=jax.ShapeDtypeStruct((B, C), jnp.float32),
        grid=(B // bpg,),
        in_specs=[
            pl.BlockSpec((bpg, HW, C), lambda b: (b, 0, 0)),
            pl.BlockSpec((1, C), lambda b: (0, 0)),
            pl.BlockSpec((1, C), lambda b: (0, 0)),
            pl.BlockSpec((C, Cr), lambda b: (0, 0)),
            pl.BlockSpec((Cr, C), lambda b: (0, 0)),
        ],
        out_specs=pl.BlockSpec((bpg, C), lambda b: (b, 0)),
        compiler_params=pltpu.CompilerParams(
            dimension_semantics=("parallel",),
        ),
    )(x, params["gamma"], params["beta"], params["w1t"], params["w2t"])

    logits = pl.pallas_call(
        _classifier_kernel,
        out_shape=jax.ShapeDtypeStruct((B, NC_pad), jnp.float32),
        grid=(1,),
        in_specs=[
            pl.BlockSpec((B, C), lambda i: (0, 0)),
            pl.BlockSpec((C, NC_pad), lambda i: (0, 0)),
        ],
        out_specs=pl.BlockSpec((B, NC_pad), lambda i: (0, 0)),
    )(pooled, params["wc_t"])

    return logits[:, :NC]


# ----------------------------------------------------------------------------
# Pure-JAX reference (mirrors the PyTorch forward from x_IN onward, f32).
# ----------------------------------------------------------------------------
def rgb_teacher_head_ref(x_nchw, gamma, beta, w1, w2, wc):
    B, C, H, W = x_nchw.shape
    mean = jnp.mean(x_nchw, axis=(2, 3), keepdims=True)
    var = jnp.mean((x_nchw - mean) ** 2, axis=(2, 3), keepdims=True)
    x_in = (x_nchw - mean) * jax.lax.rsqrt(var + 1e-5)
    x_in = x_in * gamma.reshape(1, C, 1, 1) + beta.reshape(1, C, 1, 1)
    h = jnp.einsum("bchw,oc->bohw", x_in, w1)
    h = jnp.maximum(h, 0.0)
    m = jax.nn.sigmoid(jnp.einsum("bchw,oc->bohw", h, w2))
    y = jnp.maximum(x_in * m, 1e-6) ** 3.0
    pooled = jnp.mean(y, axis=(2, 3)) ** (1.0 / 3.0)   # (B, C)
    return pooled @ wc.T


if __name__ == "__main__":
    # Small shapes consistent with the module structure (scaled down from
    # C=2048, r=16, num_classes=1000).
    B, C, H, W = 2, 256, 8, 8
    r = 16
    Cr = C // r
    NC = 16

    key = jax.random.PRNGKey(0)
    k_x, k_g, k_b, k_w1, k_w2, k_wc = jax.random.split(key, 6)

    x = jax.random.normal(k_x, (B, C, H, W), dtype=jnp.float32)
    gamma = 1.0 + 0.1 * jax.random.normal(k_g, (C,), dtype=jnp.float32)
    beta = 0.1 * jax.random.normal(k_b, (C,), dtype=jnp.float32)
    w1 = 0.05 * jax.random.normal(k_w1, (Cr, C), dtype=jnp.float32)
    w2 = 0.05 * jax.random.normal(k_w2, (C, Cr), dtype=jnp.float32)
    wc = 0.05 * jax.random.normal(k_wc, (NC, C), dtype=jnp.float32)

    params = prepare_rgb_teacher_params(gamma, beta, w1, w2, wc)
    out = jax.block_until_ready(rgb_teacher_head(x, params))

    ref = rgb_teacher_head_ref(x, gamma, beta, w1, w2, wc)
    assert out.shape == (B, NC)
    # bf16 matmul path: relaxed tolerance (f32 everywhere else).
    assert jnp.allclose(out, ref, atol=2e-2, rtol=2e-2), \
        float(jnp.max(jnp.abs(out - ref)))

    print("KERNEL_OK")
</pallas_src>

<mosaic_0001>
module attributes {stable_mosaic.version = 11 : i64} {
  func.func @_rgb_teacher_pool_kernel(%arg0: i32, %arg1: memref<2x64x256xf32, #tpu.memory_space<vmem>>, %arg2: memref<1x256xf32, #tpu.memory_space<vmem>>, %arg3: memref<1x256xf32, #tpu.memory_space<vmem>>, %arg4: memref<256x16xbf16, #tpu.memory_space<vmem>>, %arg5: memref<16x256xbf16, #tpu.memory_space<vmem>>, %arg6: memref<2x256xf32, #tpu.memory_space<vmem>>) attributes {dimension_semantics = [#tpu.dimension_semantics<parallel>], iteration_bounds = array<i64: 1>, scalar_prefetch = 0 : i64, scratch_operands = 0 : i64, tpu.core_type = #tpu.core_type<tc>, window_params = [{transform_indices = @transform_0, window_bounds = array<i64: 2, 64, 256>}, {pipeline_mode = #tpu.pipeline_mode<synchronous>, transform_indices = @transform_1, window_bounds = array<i64: 1, 256>}, {pipeline_mode = #tpu.pipeline_mode<synchronous>, transform_indices = @transform_2, window_bounds = array<i64: 1, 256>}, {pipeline_mode = #tpu.pipeline_mode<synchronous>, transform_indices = @transform_3, window_bounds = array<i64: 256, 16>}, {pipeline_mode = #tpu.pipeline_mode<synchronous>, transform_indices = @transform_4, window_bounds = array<i64: 16, 256>}, {transform_indices = @transform_5, window_bounds = array<i64: 2, 256>}]} {
    %c0 = arith.constant 0 : index
    %c0_0 = arith.constant 0 : index
    %c0_1 = arith.constant 0 : index
    %0 = vector.load %arg1[%c0, %c0_0, %c0_1] : memref<2x64x256xf32, #tpu.memory_space<vmem>>, vector<2x64x256xf32>
    %cst = arith.constant dense<0.000000e+00> : vector<2x256xf32>
    %1 = vector.multi_reduction <add>, %0, %cst [1] : vector<2x64x256xf32> to vector<2x256xf32>
    %2 = vector.shape_cast %1 : vector<2x256xf32> to vector<2x1x256xf32>
    %3 = arith.mulf %0, %0 : vector<2x64x256xf32>
    %cst_2 = arith.constant dense<0.000000e+00> : vector<2x256xf32>
    %4 = vector.multi_reduction <add>, %3, %cst_2 [1] : vector<2x64x256xf32> to vector<2x256xf32>
    %5 = vector.shape_cast %4 : vector<2x256xf32> to vector<2x1x256xf32>
    %cst_3 = arith.constant 1.562500e-02 : f32
    %6 = vector.broadcast %cst_3 : f32 to vector<2x1x256xf32>
    %7 = arith.mulf %2, %6 : vector<2x1x256xf32>
    %cst_4 = arith.constant 1.562500e-02 : f32
    %8 = vector.broadcast %cst_4 : f32 to vector<2x1x256xf32>
    %9 = arith.mulf %5, %8 : vector<2x1x256xf32>
    %10 = arith.mulf %7, %7 : vector<2x1x256xf32>
    %11 = arith.subf %9, %10 : vector<2x1x256xf32>
    %c0_5 = arith.constant 0 : index
    %c0_6 = arith.constant 0 : index
    %12 = vector.load %arg2[%c0_5, %c0_6] : memref<1x256xf32, #tpu.memory_space<vmem>>, vector<1x256xf32>
    %cst_7 = arith.constant 9.99999974E-6 : f32
    %13 = vector.broadcast %cst_7 : f32 to vector<2x1x256xf32>
    %14 = arith.addf %11, %13 : vector<2x1x256xf32>
    %15 = math.rsqrt %14 : vector<2x1x256xf32>
    %16 = vector.shape_cast %12 : vector<1x256xf32> to vector<1x1x256xf32>
    %17 = vector.broadcast %16 : vector<1x1x256xf32> to vector<2x1x256xf32>
    %18 = arith.mulf %17, %15 : vector<2x1x256xf32>
    %c0_8 = arith.constant 0 : index
    %c0_9 = arith.constant 0 : index
    %19 = vector.load %arg3[%c0_8, %c0_9] : memref<1x256xf32, #tpu.memory_space<vmem>>, vector<1x256xf32>
    %20 = arith.mulf %7, %18 : vector<2x1x256xf32>
    %21 = vector.shape_cast %19 : vector<1x256xf32> to vector<1x1x256xf32>
    %22 = vector.broadcast %21 : vector<1x1x256xf32> to vector<2x1x256xf32>
    %23 = arith.subf %22, %20 : vector<2x1x256xf32>
    %24 = vector.broadcast %18 : vector<2x1x256xf32> to vector<2x64x256xf32>
    %25 = arith.mulf %0, %24 : vector<2x64x256xf32>
    %26 = vector.broadcast %23 : vector<2x1x256xf32> to vector<2x64x256xf32>
    %27 = arith.addf %25, %26 : vector<2x64x256xf32>
    %28 = arith.truncf %27 : vector<2x64x256xf32> to vector<2x64x256xbf16>
    %29 = vector.shape_cast %28 : vector<2x64x256xbf16> to vector<128x256xbf16>
    %c0_10 = arith.constant 0 : index
    %c0_11 = arith.constant 0 : index
    %30 = vector.load %arg4[%c0_10, %c0_11] : memref<256x16xbf16, #tpu.memory_space<vmem>>, vector<256x16xbf16>
    %cst_12 = arith.constant dense<0.000000e+00> : vector<128x16xf32>
    %31 = tpu.matmul %29, %30, %cst_12 {dimension_numbers = #tpu.dot_dimension_numbers<[1], [0], [0], [1], [0, 0, 1, 1], [], []>} : vector<128x256xbf16>, vector<256x16xbf16>, vector<128x16xf32> -> vector<128x16xf32>
    %cst_13 = arith.constant 0.000000e+00 : f32
    %32 = vector.broadcast %cst_13 : f32 to vector<128x16xf32>
    %33 = arith.maximumf %31, %32 : vector<128x16xf32>
    %34 = arith.truncf %33 : vector<128x16xf32> to vector<128x16xbf16>
    %c0_14 = arith.constant 0 : index
    %c0_15 = arith.constant 0 : index
    %35 = vector.load %arg5[%c0_14, %c0_15] : memref<16x256xbf16, #tpu.memory_space<vmem>>, vector<16x256xbf16>
    %cst_16 = arith.constant dense<0.000000e+00> : vector<128x256xf32>
    %36 = tpu.matmul %34, %35, %cst_16 {dimension_numbers = #tpu.dot_dimension_numbers<[1], [0], [0], [1], [0, 0, 1, 1], [], []>} : vector<128x16xbf16>, vector<16x256xbf16>, vector<128x256xf32> -> vector<128x256xf32>
    %37 = arith.negf %36 : vector<128x256xf32>
    %38 = math.exp %37 : vector<128x256xf32>
    %cst_17 = arith.constant 1.000000e+00 : f32
    %39 = vector.broadcast %cst_17 : f32 to vector<128x256xf32>
    %40 = arith.addf %39, %38 : vector<128x256xf32>
    %41 = arith.divf %39, %40 : vector<128x256xf32>
    %42 = vector.shape_cast %41 : vector<128x256xf32> to vector<2x64x256xf32>
    %c0_18 = arith.constant 0 : index
    %c0_19 = arith.constant 0 : index
    %c0_20 = arith.constant 0 : index
    %43 = vector.load %arg1[%c0_18, %c0_19, %c0_20] : memref<2x64x256xf32, #tpu.memory_space<vmem>>, vector<2x64x256xf32>
    %44 = vector.broadcast %18 : vector<2x1x256xf32> to vector<2x64x256xf32>
    %45 = arith.mulf %43, %44 : vector<2x64x256xf32>
    %46 = vector.broadcast %23 : vector<2x1x256xf32> to vector<2x64x256xf32>
    %47 = arith.addf %45, %46 : vector<2x64x256xf32>
    %48 = arith.mulf %47, %42 : vector<2x64x256xf32>
    %cst_21 = arith.constant 9.99999997E-7 : f32
    %49 = vector.broadcast %cst_21 : f32 to vector<2x64x256xf32>
    %50 = arith.maximumf %48, %49 : vector<2x64x256xf32>
    %51 = arith.mulf %50, %50 : vector<2x64x256xf32>
    %52 = arith.mulf %51, %50 : vector<2x64x256xf32>
    %cst_22 = arith.constant dense<0.000000e+00> : vector<2x256xf32>
    %53 = vector.multi_reduction <add>, %52, %cst_22 [1] : vector<2x64x256xf32> to vector<2x256xf32>
    %cst_23 = arith.constant 1.562500e-02 : f32
    %54 = vector.broadcast %cst_23 : f32 to vector<2x256xf32>
    %55 = arith.mulf %53, %54 : vector<2x256xf32>
    %cst_24 = arith.constant 0.333333343 : f32
    %56 = vector.broadcast %cst_24 : f32 to vector<2x256xf32>
    %57 = math.powf %55, %56 : vector<2x256xf32>
    %c0_25 = arith.constant 0 : index
    %c0_26 = arith.constant 0 : index
    %58 = vector.load %arg6[%c0_25, %c0_26] : memref<2x256xf32, #tpu.memory_space<vmem>>, vector<2x256xf32>
    tpu.vector_store %arg6[%c0_25, %c0_26], %57 {strides = array<i32>} : memref<2x256xf32, #tpu.memory_space<vmem>>, vector<2x256xf32>,
    return
  }
  func.func @transform_0(%arg0: i32) -> (i32, i32, i32) {
    %c0_i32 = arith.constant 0 : i32
    %c0_i32_0 = arith.constant 0 : i32
    %c0_i32_1 = arith.constant 0 : i32
    return %arg0, %c0_i32, %c0_i32_0 : i32, i32, i32
  }
  func.func @transform_1(%arg0: i32) -> (i32, i32) {
    %c0_i32 = arith.constant 0 : i32
    %c0_i32_0 = arith.constant 0 : i32
    %c0_i32_1 = arith.constant 0 : i32
    return %c0_i32, %c0_i32_0 : i32, i32
  }
  func.func @transform_2(%arg0: i32) -> (i32, i32) {
    %c0_i32 = arith.constant 0 : i32
    %c0_i32_0 = arith.constant 0 : i32
    %c0_i32_1 = arith.constant 0 : i32
    return %c0_i32, %c0_i32_0 : i32, i32
  }
  func.func @transform_3(%arg0: i32) -> (i32, i32) {
    %c0_i32 = arith.constant 0 : i32
    %c0_i32_0 = arith.constant 0 : i32
    %c0_i32_1 = arith.constant 0 : i32
    return %c0_i32, %c0_i32_0 : i32, i32
  }
  func.func @transform_4(%arg0: i32) -> (i32, i32) {
    %c0_i32 = arith.constant 0 : i32
    %c0_i32_0 = arith.constant 0 : i32
    %c0_i32_1 = arith.constant 0 : i32
    return %c0_i32, %c0_i32_0 : i32, i32
  }
  func.func @transform_5(%arg0: i32) -> (i32, i32) {
    %c0_i32 = arith.constant 0 : i32
    %c0_i32_0 = arith.constant 0 : i32
    return %arg0, %c0_i32 : i32, i32
  }
}

</mosaic_0001>

<llo_original>
// kernel: tpu_custom_call.1
$region0: #{tpu_custom_call.1}
  #allocation0 [shape = 'u32[]', space=smem, size = 0x4, offset = 0x4, fixed_abs, tag = 'smem constant byte address 0x4 - core index']
  #allocation1 [shape = 'u32[144,128]{1,0:T(1,128)}', space=vmem, size = 0x12000, scoped, tag = 'internal scratch']
  %s0 = inlined_call_operand.hbm [shape: f32[2,64,256], index: 0, kind: input, shape index: {}]
  %s1 = inlined_call_operand.vmem [shape: f32[1,256], index: 1, kind: input, shape index: {}]
  %s2 = inlined_call_operand.vmem [shape: f32[1,256], index: 2, kind: input, shape index: {}]
  %s3 = inlined_call_operand.vmem [shape: bf16[256,16], index: 3, kind: input, shape index: {}]
  %s4 = inlined_call_operand.vmem [shape: bf16[16,256], index: 4, kind: input, shape index: {}]
  %s5 = inlined_call_operand.hbm [shape: f32[2,256], index: 5, kind: output, shape index: {}]
  %s6 = sld [smem:[#allocation0]]
  $region34: #{tpu_custom_call.1} parent=0
    _
  %s8 = ssub.s32 1, %s6
  %s9 = scalar_select 0, %s8, %s6
  $region1: #{tpu_custom_call.1} parent=0
    #allocation2 [shape = 'u8[131072]{0}', space=vmem, size = 0x20000, scoped, tag = 'input window, operand 0, single buffered']
    #allocation3 [shape = 's32[1]{0}', space=sflag, size = 0x4, scoped, tag = 'scoped memory for tpu_custom_call.1']
    #allocation4 [shape = 's32[1]{0}', space=sflag, size = 0x4, scoped, tag = 'scoped memory for tpu_custom_call.1']
    #allocation5 [shape = 'u8[2048]{0}', space=vmem, size = 0x800, scoped, tag = 'output window, operand 0, single buffered']
    %10 = vsyncpa [#allocation3], 0
    %11 = vsyncpa [#allocation4], 0
    // Predicated region
    $region2: #{tpu_custom_call.1} parent=1 // pred_check
      _
    $region3: #{tpu_custom_call.1} parent=1 // pred_check_branch
      %13 = sbr.rel (0) target = $region5
    $region4: #{tpu_custom_call.1} parent=1 // pred_region
      %s15 = ssub.s32 4096, 4096
      %16 = vsyncadd [#allocation3], %s15
      %s17 = sshll.u32 [#allocation2], 4
      %s18 = int_to_ptr.vmem [resolvable:$true] %s17
      %23 = dma.hbm_to_vmem [thread:$0]  %s0, 4096, %s18, [#allocation3], 256, 256, 16
    $region5: #{tpu_custom_call.1} parent=1 // pred_fallthru
      _
    // Predicated region
    $region6: #{tpu_custom_call.1} parent=1 // pred_check
      _
    $region7: #{tpu_custom_call.1} parent=1 // pred_check_branch
      %25 = sbr.rel (0) target = $region9
    $region8: #{tpu_custom_call.1} parent=1 // pred_region
      _
    $region9: #{tpu_custom_call.1} parent=1 // pred_fallthru
      _
    // Predicated region
    $region10: #{tpu_custom_call.1} parent=1 // pred_check
      _
    $region11: #{tpu_custom_call.1} parent=1 // pred_check_branch
      %27 = sbr.rel (0) target = $region13
    $region12: #{tpu_custom_call.1} parent=1 // pred_region
      _
    $region13: #{tpu_custom_call.1} parent=1 // pred_fallthru
      _
    // Predicated region
    $region14: #{tpu_custom_call.1} parent=1 // pred_check
      _
    $region15: #{tpu_custom_call.1} parent=1 // pred_check_branch
      %29 = sbr.rel (0) target = $region17
    $region16: #{tpu_custom_call.1} parent=1 // pred_region
      _
    $region17: #{tpu_custom_call.1} parent=1 // pred_fallthru
      _
    // Predicated region
    $region18: #{tpu_custom_call.1} parent=1 // pred_check
      _
    $region19: #{tpu_custom_call.1} parent=1 // pred_check_branch
      %31 = sbr.rel (0) target = $region21
    $region20: #{tpu_custom_call.1} parent=1 // pred_region
      _
    $region21: #{tpu_custom_call.1} parent=1 // pred_fallthru
      _
    // Predicated region
    $region22: #{tpu_custom_call.1} parent=1 // pred_check
      _
    $region23: #{tpu_custom_call.1} parent=1 // pred_check_branch
      %33 = sbr.rel (0) target = $region25
    $region24: #{tpu_custom_call.1} parent=1 // pred_region
      %34 = dma.done [#allocation3], 4096
    $region25: #{tpu_custom_call.1} parent=1 // pred_fallthru
      _
    %v36 = vld [vmem:[#allocation2] sm:$0xff]
    %v37 = vld [vmem:[#allocation2 + $0x8] sm:$0xff]
    %v38 = vld [vmem:[#allocation2 + $0x10] sm:$0xff]
    %v39 = vld [vmem:[#allocation2 + $0x18] sm:$0xff]
    %v40 = vld [vmem:[#allocation2 + $0x20] sm:$0xff]
    %v41 = vld [vmem:[#allocation2 + $0x28] sm:$0xff]
    %v42 = vld [vmem:[#allocation2 + $0x30] sm:$0xff]
    %v43 = vld [vmem:[#allocation2 + $0x38] sm:$0xff]
    %v44 = vld [vmem:[#allocation2 + $0x40] sm:$0xff]
    %v45 = vld [vmem:[#allocation2 + $0x48] sm:$0xff]
    %v46 = vld [vmem:[#allocation2 + $0x50] sm:$0xff]
    %v47 = vld [vmem:[#allocation2 + $0x58] sm:$0xff]
    %v48 = vld [vmem:[#allocation2 + $0x60] sm:$0xff]
    %v49 = vld [vmem:[#allocation2 + $0x68] sm:$0xff]
    %v50 = vld [vmem:[#allocation2 + $0x70] sm:$0xff]
    %v51 = vld [vmem:[#allocation2 + $0x78] sm:$0xff]
    %v52 = vld [vmem:[#allocation2 + $0x80] sm:$0xff]
    %v53 = vld [vmem:[#allocation2 + $0x88] sm:$0xff]
    %v54 = vld [vmem:[#allocation2 + $0x90] sm:$0xff]
    %v55 = vld [vmem:[#allocation2 + $0x98] sm:$0xff]
    %v56 = vld [vmem:[#allocation2 + $0xa0] sm:$0xff]
    %v57 = vld [vmem:[#allocation2 + $0xa8] sm:$0xff]
    %v58 = vld [vmem:[#allocation2 + $0xb0] sm:$0xff]
    %v59 = vld [vmem:[#allocation2 + $0xb8] sm:$0xff]
    %v60 = vld [vmem:[#allocation2 + $0xc0] sm:$0xff]
    %v61 = vld [vmem:[#allocation2 + $0xc8] sm:$0xff]
    %v62 = vld [vmem:[#allocation2 + $0xd0] sm:$0xff]
    %v63 = vld [vmem:[#allocation2 + $0xd8] sm:$0xff]
    %v64 = vld [vmem:[#allocation2 + $0xe0] sm:$0xff]
    %v65 = vld [vmem:[#allocation2 + $0xe8] sm:$0xff]
    %v66 = vld [vmem:[#allocation2 + $0xf0] sm:$0xff]
    %v67 = vld [vmem:[#allocation2 + $0xf8] sm:$0xff]
    %v68 = vadd.f32 %v36, %v38
    %v69 = vadd.f32 %v68, %v40
    %v70 = vadd.f32 %v69, %v42
    %v71 = vadd.f32 %v70, %v44
    %v72 = vadd.f32 %v71, %v46
    %v73 = vadd.f32 %v72, %v48
    %v74 = vadd.f32 %v73, %v50
    %v75 = vrot.slane %v74, 4
    %v76 = vadd.f32 %v74, %v75
    %v77 = vrot.slane %v76, 2
    %v78 = vadd.f32 %v76, %v77
    %v79 = vrot.slane %v78, 1
    %v80 = vadd.f32 %v78, %v79
    %v81 = vadd.f32 %v37, %v39
    %v82 = vadd.f32 %v81, %v41
    %v83 = vadd.f32 %v82, %v43
    %v84 = vadd.f32 %v83, %v45
    %v85 = vadd.f32 %v84, %v47
    %v86 = vadd.f32 %v85, %v49
    %v87 = vadd.f32 %v86, %v51
    %v88 = vrot.slane %v87, 4
    %v89 = vadd.f32 %v87, %v88
    %v90 = vrot.slane %v89, 2
    %v91 = vadd.f32 %v89, %v90
    %v92 = vrot.slane %v91, 1
    %v93 = vadd.f32 %v91, %v92
    %v94 = vadd.f32 %v52, %v54
    %v95 = vadd.f32 %v94, %v56
    %v96 = vadd.f32 %v95, %v58
    %v97 = vadd.f32 %v96, %v60
    %v98 = vadd.f32 %v97, %v62
    %v99 = vadd.f32 %v98, %v64
    %v100 = vadd.f32 %v99, %v66
    %v101 = vrot.slane %v100, 4
    %v102 = vadd.f32 %v100, %v101
    %v103 = vrot.slane %v102, 2
    %v104 = vadd.f32 %v102, %v103
    %v105 = vrot.slane %v104, 1
    %v106 = vadd.f32 %v104, %v105
    %v107 = vadd.f32 %v53, %v55
    %v108 = vadd.f32 %v107, %v57
    %v109 = vadd.f32 %v108, %v59
    %v110 = vadd.f32 %v109, %v61
    %v111 = vadd.f32 %v110, %v63
    %v112 = vadd.f32 %v111, %v65
    %v113 = vadd.f32 %v112, %v67
    %v114 = vrot.slane %v113, 4
    %v115 = vadd.f32 %v113, %v114
    %v116 = vrot.slane %v115, 2
    %v117 = vadd.f32 %v115, %v116
    %v118 = vrot.slane %v117, 1
    %v119 = vadd.f32 %v117, %v118
    %v120 = vmul.f32 %v36, %v36
    %v121 = vmul.f32 %v37, %v37
    %v122 = vmul.f32 %v38, %v38
    %v123 = vmul.f32 %v39, %v39
    %v124 = vmul.f32 %v40, %v40
    %v125 = vmul.f32 %v41, %v41
    %v126 = vmul.f32 %v42, %v42
    %v127 = vmul.f32 %v43, %v43
    %v128 = vmul.f32 %v44, %v44
    %v129 = vmul.f32 %v45, %v45
    %v130 = vmul.f32 %v46, %v46
    %v131 = vmul.f32 %v47, %v47
    %v132 = vmul.f32 %v48, %v48
    %v133 = vmul.f32 %v49, %v49
    %v134 = vmul.f32 %v50, %v50
    %v135 = vmul.f32 %v51, %v51
    %v136 = vmul.f32 %v52, %v52
    %v137 = vmul.f32 %v53, %v53
    %v138 = vmul.f32 %v54, %v54
    %v139 = vmul.f32 %v55, %v55
    %v140 = vmul.f32 %v56, %v56
    %v141 = vmul.f32 %v57, %v57
    %v142 = vmul.f32 %v58, %v58
    %v143 = vmul.f32 %v59, %v59
    %v144 = vmul.f32 %v60, %v60
    %v145 = vmul.f32 %v61, %v61
    %v146 = vmul.f32 %v62, %v62
    %v147 = vmul.f32 %v63, %v63
    %v148 = vmul.f32 %v64, %v64
    %v149 = vmul.f32 %v65, %v65
    %v150 = vmul.f32 %v66, %v66
    %v151 = vmul.f32 %v67, %v67
    %v152 = vadd.f32 %v120, %v122
    %v153 = vadd.f32 %v152, %v124
    %v154 = vadd.f32 %v153, %v126
    %v155 = vadd.f32 %v154, %v128
    %v156 = vadd.f32 %v155, %v130
    %v157 = vadd.f32 %v156, %v132
    %v158 = vadd.f32 %v157, %v134
    %v159 = vrot.slane %v158, 4
    %v160 = vadd.f32 %v158, %v159
    %v161 = vrot.slane %v160, 2
    %v162 = vadd.f32 %v160, %v161
    %v163 = vrot.slane %v162, 1
    %v164 = vadd.f32 %v162, %v163
    %v165 = vadd.f32 %v121, %v123
    %v166 = vadd.f32 %v165, %v125
    %v167 = vadd.f32 %v166, %v127
    %v168 = vadd.f32 %v167, %v129
    %v169 = vadd.f32 %v168, %v131
    %v170 = vadd.f32 %v169, %v133
    %v171 = vadd.f32 %v170, %v135
    %v172 = vrot.slane %v171, 4
    %v173 = vadd.f32 %v171, %v172
    %v174 = vrot.slane %v173, 2
    %v175 = vadd.f32 %v173, %v174
    %v176 = vrot.slane %v175, 1
    %v177 = vadd.f32 %v175, %v176
    %v178 = vadd.f32 %v136, %v138
    %v179 = vadd.f32 %v178, %v140
    %v180 = vadd.f32 %v179, %v142
    %v181 = vadd.f32 %v180, %v144
    %v182 = vadd.f32 %v181, %v146
    %v183 = vadd.f32 %v182, %v148
    %v184 = vadd.f32 %v183, %v150
    %v185 = vrot.slane %v184, 4
    %v186 = vadd.f32 %v184, %v185
    %v187 = vrot.slane %v186, 2
    %v188 = vadd.f32 %v186, %v187
    %v189 = vrot.slane %v188, 1
    %v190 = vadd.f32 %v188, %v189
    %v191 = vadd.f32 %v137, %v139
    %v192 = vadd.f32 %v191, %v141
    %v193 = vadd.f32 %v192, %v143
    %v194 = vadd.f32 %v193, %v145
    %v195 = vadd.f32 %v194, %v147
    %v196 = vadd.f32 %v195, %v149
    %v197 = vadd.f32 %v196, %v151
    %v198 = vrot.slane %v197, 4
    %v199 = vadd.f32 %v197, %v198
    %v200 = vrot.slane %v199, 2
    %v201 = vadd.f32 %v199, %v200
    %v202 = vrot.slane %v201, 1
    %v203 = vadd.f32 %v201, %v202
    %v204 = vmul.f32 %v80, 0.015625
    %v205 = vmul.f32 %v93, 0.015625
    %v206 = vmul.f32 %v106, 0.015625
    %v207 = vmul.f32 %v119, 0.015625
    %v208 = vmul.f32 %v164, 0.015625
    %v209 = vmul.f32 %v177, 0.015625
    %v210 = vmul.f32 %v190, 0.015625
    %v211 = vmul.f32 %v203, 0.015625
    %v212 = vmul.f32 %v204, %v204
    %v213 = vmul.f32 %v205, %v205
    %v214 = vmul.f32 %v206, %v206
    %v215 = vmul.f32 %v207, %v207
    %v216 = vsub.f32 %v208, %v212
    %v217 = vsub.f32 %v209, %v213
    %v218 = vsub.f32 %v210, %v214
    %v219 = vsub.f32 %v211, %v215
    %v220 = vld [vmem:[%s1] sm:$0x3]
    %v221 = vadd.f32 %v216, 1e-05
    %v222 = vadd.f32 %v217, 1e-05
    %v223 = vadd.f32 %v218, 1e-05
    %v224 = vadd.f32 %v219, 1e-05
    %v225 = vrsqrt.pop %v221
    %v226 = vrsqrt.pop %v222
    %v227 = vrsqrt.pop %v223
    %v228 = vrsqrt.pop %v224
    %v233 = vcombine.low %v225, %v226
    %v235 = vunpack.c.l.s4 1966171168
    %v236 = vunpack.c.0.s8 %v235
    %v237 = vlaneseq
    %v238 = vshrl.u32 %v237, 7
    %v239 = vsub.s32 %v236, %v238
    %v240 = vrot.slane %v233, %v239
    %v242 = vunpack.c.l.s4 1966171168
    %v243 = vunpack.c.0.s8 %v242
    %v244 = vlaneseq
    %v245 = vshrl.u32 %v244, 7
    %v246 = vsub.s32 %v243, %v245
    %v247 = vrot.slane %v240, %v246
    %v248 = vcombine.low %v227, %v228
    %v250 = vunpack.c.l.s4 1966171168
    %v251 = vunpack.c.0.s8 %v250
    %v252 = vlaneseq
    %v253 = vshrl.u32 %v252, 7
    %v254 = vsub.s32 %v251, %v253
    %v255 = vrot.slane %v248, %v254
    %v257 = vunpack.c.l.s4 1966171168
    %v258 = vunpack.c.0.s8 %v257
    %v259 = vlaneseq
    %v260 = vshrl.u32 %v259, 7
    %v261 = vsub.s32 %v258, %v260
    %v262 = vrot.slane %v255, %v261
    %v265 = vmul.f32 %v220, %v247
    %v266 = vmul.f32 %v220, %v262
    %v267 = vld [vmem:[%s2] sm:$0x3]
    %v270 = vlaneseq
    %v271 = vshrl.u32 %v270, 7
    %v272 = vsub.s32 0, %v271
    %v273 = vrot.slane %v265, %v272
    %v274 = vlaneseq
    %v275 = vshrl.u32 %v274, 7
    %v276 = vsub.s32 1, %v275
    %v277 = vrot.slane %v265, %v276
    %v278 = vlaneseq
    %v279 = vshrl.u32 %v278, 7
    %v280 = vsub.s32 0, %v279
    %v281 = vrot.slane %v266, %v280
    %v282 = vlaneseq
    %v283 = vshrl.u32 %v282, 7
    %v284 = vsub.s32 1, %v283
    %v285 = vrot.slane %v266, %v284
    %v290 = vmul.f32 %v204, %v273
    %v291 = vmul.f32 %v205, %v277
    %v292 = vmul.f32 %v206, %v281
    %v293 = vmul.f32 %v207, %v285
    %v298 = vcombine.low %v290, %v291
    %v300 = vunpack.c.l.s4 1966171168
    %v301 = vunpack.c.0.s8 %v300
    %v302 = vlaneseq
    %v303 = vshrl.u32 %v302, 7
    %v304 = vsub.s32 %v301, %v303
    %v305 = vrot.slane %v298, %v304
    %v307 = vunpack.c.l.s4 1966171168
    %v308 = vunpack.c.0.s8 %v307
    %v309 = vlaneseq
    %v310 = vshrl.u32 %v309, 7
    %v311 = vsub.s32 %v308, %v310
    %v312 = vrot.slane %v305, %v311
    %v313 = vcombine.low %v292, %v293
    %v315 = vunpack.c.l.s4 1966171168
    %v316 = vunpack.c.0.s8 %v315
    %v317 = vlaneseq
    %v318 = vshrl.u32 %v317, 7
    %v319 = vsub.s32 %v316, %v318
    %v320 = vrot.slane %v313, %v319
    %v322 = vunpack.c.l.s4 1966171168
    %v323 = vunpack.c.0.s8 %v322
    %v324 = vlaneseq
    %v325 = vshrl.u32 %v324, 7
    %v326 = vsub.s32 %v323, %v325
    %v327 = vrot.slane %v320, %v326
    %v330 = vsub.f32 %v267, %v312
    %v331 = vsub.f32 %v267, %v327
    %v332 = vmul.f32 %v36, %v273
    %v333 = vmul.f32 %v37, %v277
    %v334 = vmul.f32 %v38, %v273
    %v335 = vmul.f32 %v39, %v277
    %v336 = vmul.f32 %v40, %v273
    %v337 = vmul.f32 %v41, %v277
    %v338 = vmul.f32 %v42, %v273
    %v339 = vmul.f32 %v43, %v277
    %v340 = vmul.f32 %v44, %v273
    %v341 = vmul.f32 %v45, %v277
    %v342 = vmul.f32 %v46, %v273
    %v343 = vmul.f32 %v47, %v277
    %v344 = vmul.f32 %v48, %v273
    %v345 = vmul.f32 %v49, %v277
    %v346 = vmul.f32 %v50, %v273
    %v347 = vmul.f32 %v51, %v277
    %v348 = vmul.f32 %v52, %v281
    %v349 = vmul.f32 %v53, %v285
    %v350 = vmul.f32 %v54, %v281
    %v351 = vmul.f32 %v55, %v285
    %v352 = vmul.f32 %v56, %v281
    %v353 = vmul.f32 %v57, %v285
    %v354 = vmul.f32 %v58, %v281
    %v355 = vmul.f32 %v59, %v285
    %v356 = vmul.f32 %v60, %v281
    %v357 = vmul.f32 %v61, %v285
    %v358 = vmul.f32 %v62, %v281
    %v359 = vmul.f32 %v63, %v285
    %v360 = vmul.f32 %v64, %v281
    %v361 = vmul.f32 %v65, %v285
    %v362 = vmul.f32 %v66, %v281
    %v363 = vmul.f32 %v67, %v285
    %v366 = vlaneseq
    %v367 = vshrl.u32 %v366, 7
    %v368 = vsub.s32 0, %v367
    %v369 = vrot.slane %v330, %v368
    %v370 = vlaneseq
    %v371 = vshrl.u32 %v370, 7
    %v372 = vsub.s32 1, %v371
    %v373 = vrot.slane %v330, %v372
    %v374 = vlaneseq
    %v375 = vshrl.u32 %v374, 7
    %v376 = vsub.s32 0, %v375
    %v377 = vrot.slane %v331, %v376
    %v378 = vlaneseq
    %v379 = vshrl.u32 %v378, 7
    %v380 = vsub.s32 1, %v379
    %v381 = vrot.slane %v331, %v380
    %v386 = vadd.f32 %v332, %v369
    %v387 = vadd.f32 %v333, %v373
    %v388 = vadd.f32 %v334, %v369
    %v389 = vadd.f32 %v335, %v373
    %v390 = vadd.f32 %v336, %v369
    %v391 = vadd.f32 %v337, %v373
    %v392 = vadd.f32 %v338, %v369
    %v393 = vadd.f32 %v339, %v373
    %v394 = vadd.f32 %v340, %v369
    %v395 = vadd.f32 %v341, %v373
    %v396 = vadd.f32 %v342, %v369
    %v397 = vadd.f32 %v343, %v373
    %v398 = vadd.f32 %v344, %v369
    %v399 = vadd.f32 %v345, %v373
    %v400 = vadd.f32 %v346, %v369
    %v401 = vadd.f32 %v347, %v373
    %v402 = vadd.f32 %v348, %v377
    %v403 = vadd.f32 %v349, %v381
    %v404 = vadd.f32 %v350, %v377
    %v405 = vadd.f32 %v351, %v381
    %v406 = vadd.f32 %v352, %v377
    %v407 = vadd.f32 %v353, %v381
    %v408 = vadd.f32 %v354, %v377
    %v409 = vadd.f32 %v355, %v381
    %v410 = vadd.f32 %v356, %v377
    %v411 = vadd.f32 %v357, %v381
    %v412 = vadd.f32 %v358, %v377
    %v413 = vadd.f32 %v359, %v381
    %v414 = vadd.f32 %v360, %v377
    %v415 = vadd.f32 %v361, %v381
    %v416 = vadd.f32 %v362, %v377
    %v417 = vadd.f32 %v363, %v381
    %v418 = vpack.c.bf16 %v388, %v386
    %v419 = vpack.c.bf16 %v389, %v387
    %v420 = vpack.c.bf16 %v392, %v390
    %v421 = vpack.c.bf16 %v393, %v391
    %v422 = vpack.c.bf16 %v396, %v394
    %v423 = vpack.c.bf16 %v397, %v395
    %v424 = vpack.c.bf16 %v400, %v398
    %v425 = vpack.c.bf16 %v401, %v399
    %v426 = vpack.c.bf16 %v404, %v402
    %v427 = vpack.c.bf16 %v405, %v403
    %v428 = vpack.c.bf16 %v408, %v406
    %v429 = vpack.c.bf16 %v409, %v407
    %v430 = vpack.c.bf16 %v412, %v410
    %v431 = vpack.c.bf16 %v413, %v411
    %v432 = vpack.c.bf16 %v416, %v414
    %v433 = vpack.c.bf16 %v417, %v415
    %v434 = vld [vmem:[%s3] sm:$0xf]
    %v435 = vld [vmem:[%s3 + $0x4] sm:$0xf]
    %v436 = vld [vmem:[%s3 + $0x8] sm:$0xf]
    %v437 = vld [vmem:[%s3 + $0xc] sm:$0xf]
    %v438 = vld [vmem:[%s3 + $0x10] sm:$0xf]
    %v439 = vld [vmem:[%s3 + $0x14] sm:$0xf]
    %v440 = vld [vmem:[%s3 + $0x18] sm:$0xf]
    %v441 = vld [vmem:[%s3 + $0x1c] sm:$0xf]
    %v442 = vld [vmem:[%s3 + $0x20] sm:$0xf]
    %v443 = vld [vmem:[%s3 + $0x24] sm:$0xf]
    %v444 = vld [vmem:[%s3 + $0x28] sm:$0xf]
    %v445 = vld [vmem:[%s3 + $0x2c] sm:$0xf]
    %v446 = vld [vmem:[%s3 + $0x30] sm:$0xf]
    %v447 = vld [vmem:[%s3 + $0x34] sm:$0xf]
    %v448 = vld [vmem:[%s3 + $0x38] sm:$0xf]
    %v449 = vld [vmem:[%s3 + $0x3c] sm:$0xf]
    %v450 = vld [vmem:[%s3 + $0x40] sm:$0xf]
    %v451 = vld [vmem:[%s3 + $0x44] sm:$0xf]
    %v452 = vld [vmem:[%s3 + $0x48] sm:$0xf]
    %v453 = vld [vmem:[%s3 + $0x4c] sm:$0xf]
    %v454 = vld [vmem:[%s3 + $0x50] sm:$0xf]
    %v455 = vld [vmem:[%s3 + $0x54] sm:$0xf]
    %v456 = vld [vmem:[%s3 + $0x58] sm:$0xf]
    %v457 = vld [vmem:[%s3 + $0x5c] sm:$0xf]
    %v458 = vld [vmem:[%s3 + $0x60] sm:$0xf]
    %v459 = vld [vmem:[%s3 + $0x64] sm:$0xf]
    %v460 = vld [vmem:[%s3 + $0x68] sm:$0xf]
    %v461 = vld [vmem:[%s3 + $0x6c] sm:$0xf]
    %v462 = vld [vmem:[%s3 + $0x70] sm:$0xf]
    %v463 = vld [vmem:[%s3 + $0x74] sm:$0xf]
    %v464 = vld [vmem:[%s3 + $0x78] sm:$0xf]
    %v465 = vld [vmem:[%s3 + $0x7c] sm:$0xf]
    %v498 = vunpack.c.l.b16 %v434
    %v499 = vunpack.c.l.b16 %v435
    %v500 = vunpack.c.l.b16 %v436
    %v501 = vunpack.c.l.b16 %v437
    %v502 = vunpack.c.l.b16 %v438
    %v503 = vunpack.c.l.b16 %v439
    %v504 = vunpack.c.l.b16 %v440
    %v505 = vunpack.c.l.b16 %v441
    %v506 = vunpack.c.l.b16 %v442
    %v507 = vunpack.c.l.b16 %v443
    %v508 = vunpack.c.l.b16 %v444
    %v509 = vunpack.c.l.b16 %v445
    %v510 = vunpack.c.l.b16 %v446
    %v511 = vunpack.c.l.b16 %v447
    %v512 = vunpack.c.l.b16 %v448
    %v513 = vunpack.c.l.b16 %v449
    %v514 = vunpack.c.l.b16 %v450
    %v515 = vunpack.c.l.b16 %v451
    %v516 = vunpack.c.l.b16 %v452
    %v517 = vunpack.c.l.b16 %v453
    %v518 = vunpack.c.l.b16 %v454
    %v519 = vunpack.c.l.b16 %v455
    %v520 = vunpack.c.l.b16 %v456
    %v521 = vunpack.c.l.b16 %v457
    %v522 = vunpack.c.l.b16 %v458
    %v523 = vunpack.c.l.b16 %v459
    %v524 = vunpack.c.l.b16 %v460
    %v525 = vunpack.c.l.b16 %v461
    %v526 = vunpack.c.l.b16 %v462
    %v527 = vunpack.c.l.b16 %v463
    %v528 = vunpack.c.l.b16 %v464
    %v529 = vunpack.c.l.b16 %v465
    %v530 = vpack.c.b16 %v499, %v498
    %v531 = vpack.c.b16 %v501, %v500
    %v532 = vpack.c.b16 %v503, %v502
    %v533 = vpack.c.b16 %v505, %v504
    %v534 = vpack.c.b16 %v507, %v506
    %v535 = vpack.c.b16 %v509, %v508
    %v536 = vpack.c.b16 %v511, %v510
    %v537 = vpack.c.b16 %v513, %v512
    %v538 = vpack.c.b16 %v515, %v514
    %v539 = vpack.c.b16 %v517, %v516
    %v540 = vpack.c.b16 %v519, %v518
    %v541 = vpack.c.b16 %v521, %v520
    %v542 = vpack.c.b16 %v523, %v522
    %v543 = vpack.c.b16 %v525, %v524
    %v544 = vpack.c.b16 %v527, %v526
    %v545 = vpack.c.b16 %v529, %v528
    %562 = vmatprep.subr.bf16.mxu0 0
    %563 = vmatpush1.bf16.msra.mxu0 %v530
    %564 = vmatprep.subr.bf16.mxu0 0
    %565 = vmatpush1.bf16.msra.mxu0 %v531
    %566 = vmatprep.subr.bf16.mxu0 0
    %567 = vmatpush1.bf16.msra.mxu0 %v532
    %568 = vmatprep.subr.bf16.mxu0 0
    %569 = vmatpush1.bf16.msra.mxu0 %v533
    %570 = vmatprep.subr.bf16.mxu0 0
    %571 = vmatpush1.bf16.msra.mxu0 %v534
    %572 = vmatprep.subr.bf16.mxu0 0
    %573 = vmatpush1.bf16.msra.mxu0 %v535
    %574 = vmatprep.subr.bf16.mxu0 0
    %575 = vmatpush1.bf16.msra.mxu0 %v536
    %576 = vmatprep.subr.bf16.mxu0 0
    %577 = vmatpush1.bf16.msra.mxu0 %v537
    %578 = vmatprep.subr.bf16.mxu0 0
    %579 = vmatpush1.bf16.msra.mxu0 %v538
    %580 = vmatprep.subr.bf16.mxu0 0
    %581 = vmatpush1.bf16.msra.mxu0 %v539
    %582 = vmatprep.subr.bf16.mxu0 0
    %583 = vmatpush1.bf16.msra.mxu0 %v540
    %584 = vmatprep.subr.bf16.mxu0 0
    %585 = vmatpush1.bf16.msra.mxu0 %v541
    %586 = vmatprep.subr.bf16.mxu0 0
    %587 = vmatpush1.bf16.msra.mxu0 %v542
    %588 = vmatprep.subr.bf16.mxu0 0
    %589 = vmatpush1.bf16.msra.mxu0 %v543
    %590 = vmatprep.subr.bf16.mxu0 0
    %591 = vmatpush1.bf16.msra.mxu0 %v544
    %592 = vmatprep.subr.bf16.mxu0 0
    %593 = vmatpush1.bf16.msra.mxu0 %v545
    %594 = vmatprep.mubr.bf16.mxu0 %v419
    %595 = vmatmul.mubr.bf16.gmra.mrb[0].mxu0 %v418
    %v596 = vpop.f32.mrb[0].mxu0
    %v597 = vadd.f32 0.0, %v596
    %v598 = vpop.f32.mrb[0].mxu0
    %v599 = vpop.f32.mrb[0].mxu0
    %v600 = vadd.f32 0.0, %v599
    %v601 = vpop.f32.mrb[0].mxu0
    %602 = vmatprep.mubr.bf16.mxu0 %v421
    %603 = vmatmul.mubr.bf16.gmra.mrb[0].mxu0 %v420
    %v604 = vpop.f32.mrb[0].mxu0
    %v605 = vadd.f32 0.0, %v604
    %v606 = vpop.f32.mrb[0].mxu0
    %v607 = vpop.f32.mrb[0].mxu0
    %v608 = vadd.f32 0.0, %v607
    %v609 = vpop.f32.mrb[0].mxu0
    %610 = vmatprep.mubr.bf16.mxu0 %v423
    %611 = vmatmul.mubr.bf16.gmra.mrb[0].mxu0 %v422
    %v612 = vpop.f32.mrb[0].mxu0
    %v613 = vadd.f32 0.0, %v612
    %v614 = vpop.f32.mrb[0].mxu0
    %v615 = vpop.f32.mrb[0].mxu0
    %v616 = vadd.f32 0.0, %v615
    %v617 = vpop.f32.mrb[0].mxu0
    %618 = vmatprep.mubr.bf16.mxu0 %v425
    %619 = vmatmul.mubr.bf16.gmra.mrb[0].mxu0 %v424
    %v620 = vpop.f32.mrb[0].mxu0
    %v621 = vadd.f32 0.0, %v620
    %v622 = vpop.f32.mrb[0].mxu0
    %v623 = vpop.f32.mrb[0].mxu0
    %v624 = vadd.f32 0.0, %v623
    %v625 = vpop.f32.mrb[0].mxu0
    %626 = vmatprep.mubr.bf16.mxu0 %v427
    %627 = vmatmul.mubr.bf16.gmra.mrb[0].mxu0 %v426
    %v628 = vpop.f32.mrb[0].mxu0
    %v629 = vadd.f32 0.0, %v628
    %v630 = vpop.f32.mrb[0].mxu0
    %v631 = vpop.f32.mrb[0].mxu0
    %v632 = vadd.f32 0.0, %v631
    %v633 = vpop.f32.mrb[0].mxu0
    %634 = vmatprep.mubr.bf16.mxu0 %v429
    %635 = vmatmul.mubr.bf16.gmra.mrb[0].mxu0 %v428
    %v636 = vpop.f32.mrb[0].mxu0
    %v637 = vadd.f32 0.0, %v636
    %v638 = vpop.f32.mrb[0].mxu0
    %v639 = vpop.f32.mrb[0].mxu0
    %v640 = vadd.f32 0.0, %v639
    %v641 = vpop.f32.mrb[0].mxu0
    %642 = vmatprep.mubr.bf16.mxu0 %v431
    %643 = vmatmul.mubr.bf16.gmra.mrb[0].mxu0 %v430
    %v644 = vpop.f32.mrb[0].mxu0
    %v645 = vadd.f32 0.0, %v644
    %v646 = vpop.f32.mrb[0].mxu0
    %v647 = vpop.f32.mrb[0].mxu0
    %v648 = vadd.f32 0.0, %v647
    %v649 = vpop.f32.mrb[0].mxu0
    %650 = vmatprep.mubr.bf16.mxu0 %v433
    %651 = vmatmul.mubr.bf16.gmra.mrb[0].mxu0 %v432
    %v652 = vpop.f32.mrb[0].mxu0
    %v653 = vadd.f32 0.0, %v652
    %v654 = vpop.f32.mrb[0].mxu0
    %v655 = vpop.f32.mrb[0].mxu0
    %v656 = vadd.f32 0.0, %v655
    %v657 = vpop.f32.mrb[0].mxu0
    %658 = vdwg.mxu0
    %v659 = vmax.f32 %v597, 0.0
    %v660 = vmax.f32 %v600, 0.0
    %v661 = vmax.f32 %v605, 0.0
    %v662 = vmax.f32 %v608, 0.0
    %v663 = vmax.f32 %v613, 0.0
    %v664 = vmax.f32 %v616, 0.0
    %v665 = vmax.f32 %v621, 0.0
    %v666 = vmax.f32 %v624, 0.0
    %v667 = vmax.f32 %v629, 0.0
    %v668 = vmax.f32 %v632, 0.0
    %v669 = vmax.f32 %v637, 0.0
    %v670 = vmax.f32 %v640, 0.0
    %v671 = vmax.f32 %v645, 0.0
    %v672 = vmax.f32 %v648, 0.0
    %v673 = vmax.f32 %v653, 0.0
    %v674 = vmax.f32 %v656, 0.0
    %v675 = vpack.c.bf16 %v660, %v659
    %v676 = vpack.c.bf16 %v662, %v661
    %v677 = vpack.c.bf16 %v664, %v663
    %v678 = vpack.c.bf16 %v666, %v665
    %v679 = vpack.c.bf16 %v668, %v667
    %v680 = vpack.c.bf16 %v670, %v669
    %v681 = vpack.c.bf16 %v672, %v671
    %v682 = vpack.c.bf16 %v674, %v673
    %v683 = vld [vmem:[%s4] sm:$0xff]
    %v684 = vld [vmem:[%s4 + $0x8] sm:$0xff]
    %v687 = vunpack.c.l.b16 %v683
    %v688 = vunpack.c.h.b16 %v683
    %v689 = vunpack.c.l.b16 %v684
    %v690 = vunpack.c.h.b16 %v684
    %v691 = vpack.c.b16 %v689, %v687
    %v692 = vpack.c.b16 %v690, %v688
    %vm695 = vcmask 130048
    %v697 = vsel %vm695, %v675, 0
    %v700 = vsel %vm695, %v676, 0
    %v703 = vsel %vm695, %v677, 0
    %v706 = vsel %vm695, %v678, 0
    %v709 = vsel %vm695, %v679, 0
    %v712 = vsel %vm695, %v680, 0
    %v715 = vsel %vm695, %v681, 0
    %v718 = vsel %vm695, %v682, 0
    %720 = vmatprep.subr.bf16.mxu0 %v692
    %721 = vmatpush1.bf16.msra.mxu0 %v691
    %722 = vmatprep.subr.bf16.mxu0 0
    %723 = vmatpush1.bf16.msra.mxu0 0
    %724 = vmatprep.subr.bf16.mxu0 0
    %725 = vmatpush1.bf16.msra.mxu0 0
    %726 = vmatprep.subr.bf16.mxu0 0
    %727 = vmatpush1.bf16.msra.mxu0 0
    %728 = vmatprep.subr.bf16.mxu0 0
    %729 = vmatpush1.bf16.msra.mxu0 0
    %730 = vmatprep.subr.bf16.mxu0 0
    %731 = vmatpush1.bf16.msra.mxu0 0
    %732 = vmatprep.subr.bf16.mxu0 0
    %733 = vmatpush1.bf16.msra.mxu0 0
    %734 = vmatprep.subr.bf16.mxu0 0
    %735 = vmatpush1.bf16.msra.mxu0 0
    %736 = vmatprep.subr.bf16.mxu0 0
    %737 = vmatpush1.bf16.msra.mxu0 0
    %738 = vmatprep.subr.bf16.mxu0 0
    %739 = vmatpush1.bf16.msra.mxu0 0
    %740 = vmatprep.subr.bf16.mxu0 0
    %741 = vmatpush1.bf16.msra.mxu0 0
    %742 = vmatprep.subr.bf16.mxu0 0
    %743 = vmatpush1.bf16.msra.mxu0 0
    %744 = vmatprep.subr.bf16.mxu0 0
    %745 = vmatpush1.bf16.msra.mxu0 0
    %746 = vmatprep.subr.bf16.mxu0 0
    %747 = vmatpush1.bf16.msra.mxu0 0
    %748 = vmatprep.subr.bf16.mxu0 0
    %749 = vmatpush1.bf16.msra.mxu0 0
    %750 = vmatprep.subr.bf16.mxu0 0
    %751 = vmatpush1.bf16.msra.mxu0 0
    %752 = vmatprep.mubr.bf16.mxu0 0
    %753 = vmatmul.mubr.bf16.gmra.mrb[0].mxu0 %v697
    %v754 = vpop.f32.mrb[0].mxu0
    %v755 = vadd.f32 0.0, %v754
    %v756 = vpop.f32.mrb[0].mxu0
    %v757 = vadd.f32 0.0, %v756
    %v758 = vpop.f32.mrb[0].mxu0
    %v759 = vadd.f32 0.0, %v758
    %v760 = vpop.f32.mrb[0].mxu0
    %v761 = vadd.f32 0.0, %v760
    %762 = vmatprep.mubr.bf16.mxu0 0
    %763 = vmatmul.mubr.bf16.gmra.mrb[0].mxu0 %v700
    %v764 = vpop.f32.mrb[0].mxu0
    %v765 = vadd.f32 0.0, %v764
    %v766 = vpop.f32.mrb[0].mxu0
    %v767 = vadd.f32 0.0, %v766
    %v768 = vpop.f32.mrb[0].mxu0
    %v769 = vadd.f32 0.0, %v768
    %v770 = vpop.f32.mrb[0].mxu0
    %v771 = vadd.f32 0.0, %v770
    %772 = vmatprep.mubr.bf16.mxu0 0
    %773 = vmatmul.mubr.bf16.gmra.mrb[0].mxu0 %v703
    %v774 = vpop.f32.mrb[0].mxu0
    %v775 = vadd.f32 0.0, %v774
    %v776 = vpop.f32.mrb[0].mxu0
    %v777 = vadd.f32 0.0, %v776
    %v778 = vpop.f32.mrb[0].mxu0
    %v779 = vadd.f32 0.0, %v778
    %v780 = vpop.f32.mrb[0].mxu0
    %v781 = vadd.f32 0.0, %v780
    %782 = vmatprep.mubr.bf16.mxu0 0
    %783 = vmatmul.mubr.bf16.gmra.mrb[0].mxu0 %v706
    %v784 = vpop.f32.mrb[0].mxu0
    %v785 = vadd.f32 0.0, %v784
    %v786 = vpop.f32.mrb[0].mxu0
    %v787 = vadd.f32 0.0, %v786
    %v788 = vpop.f32.mrb[0].mxu0
    %v789 = vadd.f32 0.0, %v788
    %v790 = vpop.f32.mrb[0].mxu0
    %v791 = vadd.f32 0.0, %v790
    %792 = vmatprep.mubr.bf16.mxu0 0
    %793 = vmatmul.mubr.bf16.gmra.mrb[0].mxu0 %v709
    %v794 = vpop.f32.mrb[0].mxu0
    %v795 = vadd.f32 0.0, %v794
    %v796 = vpop.f32.mrb[0].mxu0
    %v797 = vadd.f32 0.0, %v796
    %v798 = vpop.f32.mrb[0].mxu0
    %v799 = vadd.f32 0.0, %v798
    %v800 = vpop.f32.mrb[0].mxu0
    %v801 = vadd.f32 0.0, %v800
    %802 = vmatprep.mubr.bf16.mxu0 0
    %803 = vmatmul.mubr.bf16.gmra.mrb[0].mxu0 %v712
    %v804 = vpop.f32.mrb[0].mxu0
    %v805 = vadd.f32 0.0, %v804
    %v806 = vpop.f32.mrb[0].mxu0
    %v807 = vadd.f32 0.0, %v806
    %v808 = vpop.f32.mrb[0].mxu0
    %v809 = vadd.f32 0.0, %v808
    %v810 = vpop.f32.mrb[0].mxu0
    %v811 = vadd.f32 0.0, %v810
    %812 = vmatprep.mubr.bf16.mxu0 0
    %813 = vmatmul.mubr.bf16.gmra.mrb[0].mxu0 %v715
    %v814 = vpop.f32.mrb[0].mxu0
    %v815 = vadd.f32 0.0, %v814
    %v816 = vpop.f32.mrb[0].mxu0
    %v817 = vadd.f32 0.0, %v816
    %v818 = vpop.f32.mrb[0].mxu0
    %v819 = vadd.f32 0.0, %v818
    %v820 = vpop.f32.mrb[0].mxu0
    %v821 = vadd.f32 0.0, %v820
    %822 = vmatprep.mubr.bf16.mxu0 0
    %823 = vmatmul.mubr.bf16.gmra.mrb[0].mxu0 %v718
    %v824 = vpop.f32.mrb[0].mxu0
    %v825 = vadd.f32 0.0, %v824
    %v826 = vpop.f32.mrb[0].mxu0
    %v827 = vadd.f32 0.0, %v826
    %v828 = vpop.f32.mrb[0].mxu0
    %v829 = vadd.f32 0.0, %v828
    %v830 = vpop.f32.mrb[0].mxu0
    %v831 = vadd.f32 0.0, %v830
    %832 = vdwg.mxu0
    %v833 = vxor.u32 %v755, 2147483648
    %v834 = vxor.u32 %v757, 2147483648
    %v835 = vxor.u32 %v759, 2147483648
    %v836 = vxor.u32 %v761, 2147483648
    %v837 = vxor.u32 %v765, 2147483648
    %v838 = vxor.u32 %v767, 2147483648
    %v839 = vxor.u32 %v769, 2147483648
    %v840 = vxor.u32 %v771, 2147483648
    %v841 = vxor.u32 %v775, 2147483648
    %v842 = vxor.u32 %v777, 2147483648
    %v843 = vxor.u32 %v779, 2147483648
    %v844 = vxor.u32 %v781, 2147483648
    %v845 = vxor.u32 %v785, 2147483648
    %v846 = vxor.u32 %v787, 2147483648
    %v847 = vxor.u32 %v789, 2147483648
    %v848 = vxor.u32 %v791, 2147483648
    %v849 = vxor.u32 %v795, 2147483648
    %v850 = vxor.u32 %v797, 2147483648
    %v851 = vxor.u32 %v799, 2147483648
    %v852 = vxor.u32 %v801, 2147483648
    %v853 = vxor.u32 %v805, 2147483648
    %v854 = vxor.u32 %v807, 2147483648
    %v855 = vxor.u32 %v809, 2147483648
    %v856 = vxor.u32 %v811, 2147483648
    %v857 = vxor.u32 %v815, 2147483648
    %v858 = vxor.u32 %v817, 2147483648
    %v859 = vxor.u32 %v819, 2147483648
    %v860 = vxor.u32 %v821, 2147483648
    %v861 = vxor.u32 %v825, 2147483648
    %v862 = vxor.u32 %v827, 2147483648
    %v863 = vxor.u32 %v829, 2147483648
    %v864 = vxor.u32 %v831, 2147483648
    %v865 = vmul.f32 %v833, 1.442695
    %v866 = vpow.pop %v865
    %v867 = vmul.f32 %v834, 1.442695
    %v868 = vpow.pop %v867
    %v869 = vmul.f32 %v835, 1.442695
    %v870 = vpow.pop %v869
    %v871 = vmul.f32 %v836, 1.442695
    %v872 = vpow.pop %v871
    %v873 = vmul.f32 %v837, 1.442695
    %v874 = vpow.pop %v873
    %v875 = vmul.f32 %v838, 1.442695
    %v876 = vpow.pop %v875
    %v877 = vmul.f32 %v839, 1.442695
    %v878 = vpow.pop %v877
    %v879 = vmul.f32 %v840, 1.442695
    %v880 = vpow.pop %v879
    %v881 = vmul.f32 %v841, 1.442695
    %v882 = vpow.pop %v881
    %v883 = vmul.f32 %v842, 1.442695
    %v884 = vpow.pop %v883
    %v885 = vmul.f32 %v843, 1.442695
    %v886 = vpow.pop %v885
    %v887 = vmul.f32 %v844, 1.442695
    %v888 = vpow.pop %v887
    %v889 = vmul.f32 %v845, 1.442695
    %v890 = vpow.pop %v889
    %v891 = vmul.f32 %v846, 1.442695
    %v892 = vpow.pop %v891
    %v893 = vmul.f32 %v847, 1.442695
    %v894 = vpow.pop %v893
    %v895 = vmul.f32 %v848, 1.442695
    %v896 = vpow.pop %v895
    %v897 = vmul.f32 %v849, 1.442695
    %v898 = vpow.pop %v897
    %v899 = vmul.f32 %v850, 1.442695
    %v900 = vpow.pop %v899
    %v901 = vmul.f32 %v851, 1.442695
    %v902 = vpow.pop %v901
    %v903 = vmul.f32 %v852, 1.442695
    %v904 = vpow.pop %v903
    %v905 = vmul.f32 %v853, 1.442695
    %v906 = vpow.pop %v905
    %v907 = vmul.f32 %v854, 1.442695
    %v908 = vpow.pop %v907
    %v909 = vmul.f32 %v855, 1.442695
    %v910 = vpow.pop %v909
    %v911 = vmul.f32 %v856, 1.442695
    %v912 = vpow.pop %v911
    %v913 = vmul.f32 %v857, 1.442695
    %v914 = vpow.pop %v913
    %v915 = vmul.f32 %v858, 1.442695
    %v916 = vpow.pop %v915
    %v917 = vmul.f32 %v859, 1.442695
    %v918 = vpow.pop %v917
    %v919 = vmul.f32 %v860, 1.442695
    %v920 = vpow.pop %v919
    %v921 = vmul.f32 %v861, 1.442695
    %v922 = vpow.pop %v921
    %v923 = vmul.f32 %v862, 1.442695
    %v924 = vpow.pop %v923
    %v925 = vmul.f32 %v863, 1.442695
    %v926 = vpow.pop %v925
    %v927 = vmul.f32 %v864, 1.442695
    %v928 = vpow.pop %v927
    %v929 = vadd.f32 %v866, 1.0
    %v930 = vadd.f32 %v868, 1.0
    %v931 = vadd.f32 %v870, 1.0
    %v932 = vadd.f32 %v872, 1.0
    %v933 = vadd.f32 %v874, 1.0
    %v934 = vadd.f32 %v876, 1.0
    %v935 = vadd.f32 %v878, 1.0
    %v936 = vadd.f32 %v880, 1.0
    %v937 = vadd.f32 %v882, 1.0
    %v938 = vadd.f32 %v884, 1.0
    %v939 = vadd.f32 %v886, 1.0
    %v940 = vadd.f32 %v888, 1.0
    %v941 = vadd.f32 %v890, 1.0
    %v942 = vadd.f32 %v892, 1.0
    %v943 = vadd.f32 %v894, 1.0
    %v944 = vadd.f32 %v896, 1.0
    %v945 = vadd.f32 %v898, 1.0
    %v946 = vadd.f32 %v900, 1.0
    %v947 = vadd.f32 %v902, 1.0
    %v948 = vadd.f32 %v904, 1.0
    %v949 = vadd.f32 %v906, 1.0
    %v950 = vadd.f32 %v908, 1.0
    %v951 = vadd.f32 %v910, 1.0
    %v952 = vadd.f32 %v912, 1.0
    %v953 = vadd.f32 %v914, 1.0
    %v954 = vadd.f32 %v916, 1.0
    %v955 = vadd.f32 %v918, 1.0
    %v956 = vadd.f32 %v920, 1.0
    %v957 = vadd.f32 %v922, 1.0
    %v958 = vadd.f32 %v924, 1.0
    %v959 = vadd.f32 %v926, 1.0
    %v960 = vadd.f32 %v928, 1.0
    %v961 = vrcp.pop %v929
    %v962 = vmul.f32 1.0, %v961
    %v963 = vrcp.pop %v930
    %v964 = vmul.f32 1.0, %v963
    %v965 = vrcp.pop %v931
    %v966 = vmul.f32 1.0, %v965
    %v967 = vrcp.pop %v932
    %v968 = vmul.f32 1.0, %v967
    %v969 = vrcp.pop %v933
    %v970 = vmul.f32 1.0, %v969
    %v971 = vrcp.pop %v934
    %v972 = vmul.f32 1.0, %v971
    %v973 = vrcp.pop %v935
    %v974 = vmul.f32 1.0, %v973
    %v975 = vrcp.pop %v936
    %v976 = vmul.f32 1.0, %v975
    %v977 = vrcp.pop %v937
    %v978 = vmul.f32 1.0, %v977
    %v979 = vrcp.pop %v938
    %v980 = vmul.f32 1.0, %v979
    %v981 = vrcp.pop %v939
    %v982 = vmul.f32 1.0, %v981
    %v983 = vrcp.pop %v940
    %v984 = vmul.f32 1.0, %v983
    %v985 = vrcp.pop %v941
    %v986 = vmul.f32 1.0, %v985
    %v987 = vrcp.pop %v942
    %v988 = vmul.f32 1.0, %v987
    %v989 = vrcp.pop %v943
    %v990 = vmul.f32 1.0, %v989
    %v991 = vrcp.pop %v944
    %v992 = vmul.f32 1.0, %v991
    %v993 = vrcp.pop %v945
    %v994 = vmul.f32 1.0, %v993
    %v995 = vrcp.pop %v946
    %v996 = vmul.f32 1.0, %v995
    %v997 = vrcp.pop %v947
    %v998 = vmul.f32 1.0, %v997
    %v999 = vrcp.pop %v948
    %v1000 = vmul.f32 1.0, %v999
    %v1001 = vrcp.pop %v949
    %v1002 = vmul.f32 1.0, %v1001
    %v1003 = vrcp.pop %v950
    %v1004 = vmul.f32 1.0, %v1003
    %v1005 = vrcp.pop %v951
    %v1006 = vmul.f32 1.0, %v1005
    %v1007 = vrcp.pop %v952
    %v1008 = vmul.f32 1.0, %v1007
    %v1009 = vrcp.pop %v953
    %v1010 = vmul.f32 1.0, %v1009
    %v1011 = vrcp.pop %v954
    %v1012 = vmul.f32 1.0, %v1011
    %v1013 = vrcp.pop %v955
    %v1014 = vmul.f32 1.0, %v1013
    %v1015 = vrcp.pop %v956
    %v1016 = vmul.f32 1.0, %v1015
    %v1017 = vrcp.pop %v957
    %v1018 = vmul.f32 1.0, %v1017
    %v1019 = vrcp.pop %v958
    %v1020 = vmul.f32 1.0, %v1019
    %v1021 = vrcp.pop %v959
    %v1022 = vmul.f32 1.0, %v1021
    %v1023 = vrcp.pop %v960
    %v1024 = vmul.f32 1.0, %v1023
    %v1025 = vmul.f32 %v386, %v962
    %v1026 = vmul.f32 %v387, %v964
    %v1027 = vmul.f32 %v388, %v966
    %v1028 = vmul.f32 %v389, %v968
    %v1029 = vmul.f32 %v390, %v970
    %v1030 = vmul.f32 %v391, %v972
    %v1031 = vmul.f32 %v392, %v974
    %v1032 = vmul.f32 %v393, %v976
    %v1033 = vmul.f32 %v394, %v978
    %v1034 = vmul.f32 %v395, %v980
    %v1035 = vmul.f32 %v396, %v982
    %v1036 = vmul.f32 %v397, %v984
    %v1037 = vmul.f32 %v398, %v986
    %v1038 = vmul.f32 %v399, %v988
    %v1039 = vmul.f32 %v400, %v990
    %v1040 = vmul.f32 %v401, %v992
    %v1041 = vmul.f32 %v402, %v994
    %v1042 = vmul.f32 %v403, %v996
    %v1043 = vmul.f32 %v404, %v998
    %v1044 = vmul.f32 %v405, %v1000
    %v1045 = vmul.f32 %v406, %v1002
    %v1046 = vmul.f32 %v407, %v1004
    %v1047 = vmul.f32 %v408, %v1006
    %v1048 = vmul.f32 %v409, %v1008
    %v1049 = vmul.f32 %v410, %v1010
    %v1050 = vmul.f32 %v411, %v1012
    %v1051 = vmul.f32 %v412, %v1014
    %v1052 = vmul.f32 %v413, %v1016
    %v1053 = vmul.f32 %v414, %v1018
    %v1054 = vmul.f32 %v415, %v1020
    %v1055 = vmul.f32 %v416, %v1022
    %v1056 = vmul.f32 %v417, %v1024
    %v1057 = vmax.f32 %v1025, 1e-06
    %v1058 = vmax.f32 %v1026, 1e-06
    %v1059 = vmax.f32 %v1027, 1e-06
    %v1060 = vmax.f32 %v1028, 1e-06
    %v1061 = vmax.f32 %v1029, 1e-06
    %v1062 = vmax.f32 %v1030, 1e-06
    %v1063 = vmax.f32 %v1031, 1e-06
    %v1064 = vmax.f32 %v1032, 1e-06
    %v1065 = vmax.f32 %v1033, 1e-06
    %v1066 = vmax.f32 %v1034, 1e-06
    %v1067 = vmax.f32 %v1035, 1e-06
    %v1068 = vmax.f32 %v1036, 1e-06
    %v1069 = vmax.f32 %v1037, 1e-06
    %v1070 = vmax.f32 %v1038, 1e-06
    %v1071 = vmax.f32 %v1039, 1e-06
    %v1072 = vmax.f32 %v1040, 1e-06
    %v1073 = vmax.f32 %v1041, 1e-06
    %v1074 = vmax.f32 %v1042, 1e-06
    %v1075 = vmax.f32 %v1043, 1e-06
    %v1076 = vmax.f32 %v1044, 1e-06
    %v1077 = vmax.f32 %v1045, 1e-06
    %v1078 = vmax.f32 %v1046, 1e-06
    %v1079 = vmax.f32 %v1047, 1e-06
    %v1080 = vmax.f32 %v1048, 1e-06
    %v1081 = vmax.f32 %v1049, 1e-06
    %v1082 = vmax.f32 %v1050, 1e-06
    %v1083 = vmax.f32 %v1051, 1e-06
    %v1084 = vmax.f32 %v1052, 1e-06
    %v1085 = vmax.f32 %v1053, 1e-06
    %v1086 = vmax.f32 %v1054, 1e-06
    %v1087 = vmax.f32 %v1055, 1e-06
    %v1088 = vmax.f32 %v1056, 1e-06
    %v1089 = vmul.f32 %v1057, %v1057
    %v1090 = vmul.f32 %v1058, %v1058
    %v1091 = vmul.f32 %v1059, %v1059
    %v1092 = vmul.f32 %v1060, %v1060
    %v1093 = vmul.f32 %v1061, %v1061
    %v1094 = vmul.f32 %v1062, %v1062
    %v1095 = vmul.f32 %v1063, %v1063
    %v1096 = vmul.f32 %v1064, %v1064
    %v1097 = vmul.f32 %v1065, %v1065
    %v1098 = vmul.f32 %v1066, %v1066
    %v1099 = vmul.f32 %v1067, %v1067
    %v1100 = vmul.f32 %v1068, %v1068
    %v1101 = vmul.f32 %v1069, %v1069
    %v1102 = vmul.f32 %v1070, %v1070
    %v1103 = vmul.f32 %v1071, %v1071
    %v1104 = vmul.f32 %v1072, %v1072
    %v1105 = vmul.f32 %v1073, %v1073
    %v1106 = vmul.f32 %v1074, %v1074
    %v1107 = vmul.f32 %v1075, %v1075
    %v1108 = vmul.f32 %v1076, %v1076
    %v1109 = vmul.f32 %v1077, %v1077
    %v1110 = vmul.f32 %v1078, %v1078
    %v1111 = vmul.f32 %v1079, %v1079
    %v1112 = vmul.f32 %v1080, %v1080
    %v1113 = vmul.f32 %v1081, %v1081
    %v1114 = vmul.f32 %v1082, %v1082
    %v1115 = vmul.f32 %v1083, %v1083
    %v1116 = vmul.f32 %v1084, %v1084
    %v1117 = vmul.f32 %v1085, %v1085
    %v1118 = vmul.f32 %v1086, %v1086
    %v1119 = vmul.f32 %v1087, %v1087
    %v1120 = vmul.f32 %v1088, %v1088
    %v1121 = vmul.f32 %v1089, %v1057
    %v1122 = vmul.f32 %v1090, %v1058
    %v1123 = vmul.f32 %v1091, %v1059
    %v1124 = vmul.f32 %v1092, %v1060
    %v1125 = vmul.f32 %v1093, %v1061
    %v1126 = vmul.f32 %v1094, %v1062
    %v1127 = vmul.f32 %v1095, %v1063
    %v1128 = vmul.f32 %v1096, %v1064
    %v1129 = vmul.f32 %v1097, %v1065
    %v1130 = vmul.f32 %v1098, %v1066
    %v1131 = vmul.f32 %v1099, %v1067
    %v1132 = vmul.f32 %v1100, %v1068
    %v1133 = vmul.f32 %v1101, %v1069
    %v1134 = vmul.f32 %v1102, %v1070
    %v1135 = vmul.f32 %v1103, %v1071
    %v1136 = vmul.f32 %v1104, %v1072
    %v1137 = vmul.f32 %v1105, %v1073
    %v1138 = vmul.f32 %v1106, %v1074
    %v1139 = vmul.f32 %v1107, %v1075
    %v1140 = vmul.f32 %v1108, %v1076
    %v1141 = vmul.f32 %v1109, %v1077
    %v1142 = vmul.f32 %v1110, %v1078
    %v1143 = vmul.f32 %v1111, %v1079
    %v1144 = vmul.f32 %v1112, %v1080
    %v1145 = vmul.f32 %v1113, %v1081
    %v1146 = vmul.f32 %v1114, %v1082
    %v1147 = vmul.f32 %v1115, %v1083
    %v1148 = vmul.f32 %v1116, %v1084
    %v1149 = vmul.f32 %v1117, %v1085
    %v1150 = vmul.f32 %v1118, %v1086
    %v1151 = vmul.f32 %v1119, %v1087
    %v1152 = vmul.f32 %v1120, %v1088
    %v1153 = vadd.f32 %v1121, %v1123
    %v1154 = vadd.f32 %v1153, %v1125
    %v1155 = vadd.f32 %v1154, %v1127
    %v1156 = vadd.f32 %v1155, %v1129
    %v1157 = vadd.f32 %v1156, %v1131
    %v1158 = vadd.f32 %v1157, %v1133
    %v1159 = vadd.f32 %v1158, %v1135
    %v1160 = vrot.slane %v1159, 4
    %v1161 = vadd.f32 %v1159, %v1160
    %v1162 = vrot.slane %v1161, 2
    %v1163 = vadd.f32 %v1161, %v1162
    %v1164 = vrot.slane %v1163, 1
    %v1165 = vadd.f32 %v1163, %v1164
    %v1166 = vadd.f32 %v1122, %v1124
    %v1167 = vadd.f32 %v1166, %v1126
    %v1168 = vadd.f32 %v1167, %v1128
    %v1169 = vadd.f32 %v1168, %v1130
    %v1170 = vadd.f32 %v1169, %v1132
    %v1171 = vadd.f32 %v1170, %v1134
    %v1172 = vadd.f32 %v1171, %v1136
    %v1173 = vrot.slane %v1172, 4
    %v1174 = vadd.f32 %v1172, %v1173
    %v1175 = vrot.slane %v1174, 2
    %v1176 = vadd.f32 %v1174, %v1175
    %v1177 = vrot.slane %v1176, 1
    %v1178 = vadd.f32 %v1176, %v1177
    %v1179 = vadd.f32 %v1137, %v1139
    %v1180 = vadd.f32 %v1179, %v1141
    %v1181 = vadd.f32 %v1180, %v1143
    %v1182 = vadd.f32 %v1181, %v1145
    %v1183 = vadd.f32 %v1182, %v1147
    %v1184 = vadd.f32 %v1183, %v1149
    %v1185 = vadd.f32 %v1184, %v1151
    %v1186 = vrot.slane %v1185, 4
    %v1187 = vadd.f32 %v1185, %v1186
    %v1188 = vrot.slane %v1187, 2
    %v1189 = vadd.f32 %v1187, %v1188
    %v1190 = vrot.slane %v1189, 1
    %v1191 = vadd.f32 %v1189, %v1190
    %v1192 = vadd.f32 %v1138, %v1140
    %v1193 = vadd.f32 %v1192, %v1142
    %v1194 = vadd.f32 %v1193, %v1144
    %v1195 = vadd.f32 %v1194, %v1146
    %v1196 = vadd.f32 %v1195, %v1148
    %v1197 = vadd.f32 %v1196, %v1150
    %v1198 = vadd.f32 %v1197, %v1152
    %v1199 = vrot.slane %v1198, 4
    %v1200 = vadd.f32 %v1198, %v1199
    %v1201 = vrot.slane %v1200, 2
    %v1202 = vadd.f32 %v1200, %v1201
    %v1203 = vrot.slane %v1202, 1
    %v1204 = vadd.f32 %v1202, %v1203
    %v1205 = vmul.f32 %v1165, 0.015625
    %v1206 = vmul.f32 %v1178, 0.015625
    %v1207 = vmul.f32 %v1191, 0.015625
    %v1208 = vmul.f32 %v1204, 0.015625
    %v1209 = vpow.f32 %v1205, 0.33333334
    %v1210 = vpow.f32 %v1206, 0.33333334
    %v1211 = vpow.f32 %v1207, 0.33333334
    %v1212 = vpow.f32 %v1208, 0.33333334
    %v1217 = vcombine.low %v1209, %v1210
    %v1219 = vunpack.c.l.s4 1983009808
    %v1220 = vunpack.c.0.s8 %v1219
    %v1221 = vlaneseq
    %v1222 = vshrl.u32 %v1221, 7
    %v1223 = vsub.s32 %v1220, %v1222
    %v1224 = vrot.slane %v1217, %v1223
    %v1225 = vcombine.low %v1211, %v1212
    %v1227 = vunpack.c.l.s4 1983009808
    %v1228 = vunpack.c.0.s8 %v1227
    %v1229 = vlaneseq
    %v1230 = vshrl.u32 %v1229, 7
    %v1231 = vsub.s32 %v1228, %v1230
    %v1232 = vrot.slane %v1225, %v1231
    %vm1233 = vcmask 1044484
    %v1234 = vsel %vm1233, %v1224, %v1224
    %vm1235 = vcmask 1046534
    %v1236 = vsel %vm1235, %v1224, %v1234
    %v1237 = vrot.slane %v1232, 7
    %vm1238 = vcmask 1041409
    %v1239 = vsel %vm1238, %v1237, %v1236
    %vm1240 = vcmask 1043459
    %v1241 = vsel %vm1240, %v1237, %v1239
    %vm1242 = vcmask 1045509
    %v1243 = vsel %vm1242, %v1237, %v1241
    %vm1244 = vcmask 1047559
    %v1245 = vsel %vm1244, %v1237, %v1243
    %1247 = vst [vmem:[#allocation5] sm:$0xf] %v1245
    // Predicated region
    $region26: #{tpu_custom_call.1} parent=1 // pred_check
      _
    $region27: #{tpu_custom_call.1} parent=1 // pred_check_branch
      %1249 = sbr.rel (0) target = $region29
    $region28: #{tpu_custom_call.1} parent=1 // pred_region
      %s1251 = ssub.s32 64, 64
      %1252 = vsyncadd [#allocation4], %s1251
      %s1254 = sshll.u32 [#allocation5], 4
      %s1255 = int_to_ptr.vmem [resolvable:$true] %s1254
      %1257 = dma.vmem_to_hbm [thread:$0]  %s1255, 64, %s5, [#allocation4]
    $region29: #{tpu_custom_call.1} parent=1 // pred_fallthru
      _
    // Predicated region
    $region30: #{tpu_custom_call.1} parent=1 // pred_check
      _
    $region31: #{tpu_custom_call.1} parent=1 // pred_check_branch
      %1259 = sbr.rel (0) target = $region33
    $region32: #{tpu_custom_call.1} parent=1 // pred_region
      %1260 = dma.done [#allocation4], 64
    $region33: #{tpu_custom_call.1} parent=1 // pred_fallthru
      _
    %1261 = vsyncpa [#allocation3], 1
    %1262 = vsyncpa [#allocation4], 1

</llo_original>
